<compile_context>
chip_gen: v7x
topology: tpu7x:2x2x1
jax: 0.10.0
libtpu: 0.0.40
codegen_flags: <defaults>
</compile_context>

<pallas_src>
import jax
import jax.numpy as jnp
from jax import lax
from jax.experimental import pallas as pl
from jax.experimental.pallas import tpu as pltpu


def _round_up(x: int, m: int) -> int:
    return ((x + m - 1) // m) * m


def _classifier_kernel(x_ref, w1_ref, b1_ref, w2_ref, b2_ref, o_ref):
    # x_ref:  (TB, E)    CLS-token embeddings tile
    # w1_ref: (E, E)     fc1 weight, PyTorch (out, in) layout (resident)
    # b1_ref: (1, E)     fc1 bias (f32)
    # w2_ref: (CLp, E)   fc2 weight, (out, in) layout, out padded to 128 (resident)
    # b2_ref: (1, CLp)   fc2 bias (f32, padded)
    # o_ref:  (TB, CLp)  logits tile (lane-dense)
    x = x_ref[...]

    # fc1: contract x's E with w1's in-dim (trans-B contraction, no wrapper
    # transpose), f32 accumulation on the MXU.
    h = lax.dot_general(
        x, w1_ref[...], (((1,), (1,)), ((), ())),
        preferred_element_type=jnp.float32)
    h = jnp.tanh(h + b1_ref[...])          # bias + tanh in f32 (EUP slot)

    # fc2: cast bounded activations to the weight dtype (bf16 path) for the MXU.
    h = h.astype(w2_ref.dtype)
    logits = lax.dot_general(
        h, w2_ref[...], (((1,), (1,)), ((), ())),
        preferred_element_type=jnp.float32)
    o_ref[...] = (logits + b2_ref[...]).astype(o_ref.dtype)


def classifier_forward(x, w1, b1, w2, b2, *, block_b=128, mxu_dtype=None):
    """Forward pass of the Classifier head.

    x:  (B, S, E)
    w1: (E, E)  PyTorch nn.Linear layout (out, in)
    b1: (E,)
    w2: (CL, E) PyTorch nn.Linear layout (out, in)
    b2: (CL,)
    Returns logits of shape (B, CL).
    """
    B, S, E = x.shape
    CL, E_in = w2.shape
    assert E_in == E and w1.shape == (E, E)

    cls = x[:, 0, :]                                  # (B, E) -- glue slice

    # Optional low-precision MXU operands (f32 accumulate stays in-kernel).
    if mxu_dtype is not None:
        cls = cls.astype(mxu_dtype)
        w1 = w1.astype(mxu_dtype)
        w2 = w2.astype(mxu_dtype)

    # Lane-dense output: pad class dim up to a multiple of 128 with zeros.
    CLp = _round_up(max(CL, 1), 128)
    if CLp != CL:
        w2 = jnp.pad(w2, ((0, CLp - CL), (0, 0)))
        b2 = jnp.pad(b2, (0, CLp - CL))

    # Sublane-aligned batch tiling; batch axis becomes a "parallel" grid axis.
    sub = 16 if cls.dtype == jnp.bfloat16 else 8
    TB = min(block_b, _round_up(B, sub))
    Bp = _round_up(B, TB)
    if Bp != B:
        cls = jnp.pad(cls, ((0, Bp - B), (0, 0)))

    # Biases kept in f32 so the bias-add / tanh path is f32 on every chip.
    b1_2d = b1.astype(jnp.float32).reshape(1, E)
    b2_2d = b2.astype(jnp.float32).reshape(1, CLp)

    grid = (Bp // TB,)

    cost = pl.CostEstimate(
        flops=2 * Bp * E * E + 2 * Bp * E * CLp,
        transcendentals=Bp * E,
        bytes_accessed=(cls.size * cls.dtype.itemsize
                        + w1.size * w1.dtype.itemsize
                        + w2.size * w2.dtype.itemsize
                        + Bp * CLp * x.dtype.itemsize),
    )

    out = pl.pallas_call(
        _classifier_kernel,
        out_shape=jax.ShapeDtypeStruct((Bp, CLp), x.dtype),
        grid=grid,
        in_specs=[
            pl.BlockSpec((TB, E), lambda i: (i, 0)),     # x tile, pipelined over batch
            pl.BlockSpec((E, E), lambda i: (0, 0)),      # w1 resident in VMEM
            pl.BlockSpec((1, E), lambda i: (0, 0)),      # b1 resident
            pl.BlockSpec((CLp, E), lambda i: (0, 0)),    # w2 resident
            pl.BlockSpec((1, CLp), lambda i: (0, 0)),    # b2 resident
        ],
        out_specs=pl.BlockSpec((TB, CLp), lambda i: (i, 0)),
        compiler_params=pltpu.CompilerParams(
            dimension_semantics=("parallel",)),
        cost_estimate=cost,
    )(cls, w1, b1_2d, w2, b2_2d)

    # Slice padded batch rows / padded class columns back off.
    return out[:B, :CL]

    # TODO(synk): for very large E (>=2048) or CL (>=~10k) on v7x (64 MiB VMEM),
    # add K/N grid axes over E/CL with an f32 scratch accumulator instead of
    # keeping the full weights resident.


def init_params(key, embed_dim, n_classes, dtype=jnp.float32):
    """Deterministic init mimicking nn.Linear's uniform(-1/sqrt(fan_in), +1/sqrt(fan_in))."""
    k1, k2, k3, k4 = jax.random.split(key, 4)
    bound = 1.0 / jnp.sqrt(embed_dim)
    w1 = jax.random.uniform(k1, (embed_dim, embed_dim), dtype, -bound, bound)
    b1 = jax.random.uniform(k2, (embed_dim,), dtype, -bound, bound)
    w2 = jax.random.uniform(k3, (n_classes, embed_dim), dtype, -bound, bound)
    b2 = jax.random.uniform(k4, (n_classes,), dtype, -bound, bound)
    return w1, b1, w2, b2


if __name__ == "__main__":
    B, S, E, CL = 2, 8, 32, 10

    key = jax.random.PRNGKey(0)
    kx, kp = jax.random.split(key)
    x = jax.random.normal(kx, (B, S, E), dtype=jnp.float32)
    w1, b1, w2, b2 = init_params(kp, E, CL)

    # Plain-JAX reference (same semantics as the PyTorch module).
    ref = jnp.tanh(x[:, 0, :] @ w1.T + b1) @ w2.T + b2

    # f32 path.
    logits = jax.block_until_ready(classifier_forward(x, w1, b1, w2, b2))
    assert logits.shape == (B, CL)
    assert jnp.allclose(logits, ref, atol=1e-4, rtol=1e-4)

    # bf16 MXU-operand path (f32 accumulate / bias / tanh): looser tolerance.
    logits_bf16 = jax.block_until_ready(
        classifier_forward(x, w1, b1, w2, b2, mxu_dtype=jnp.bfloat16))
    assert logits_bf16.shape == (B, CL)
    assert jnp.allclose(logits_bf16, ref, atol=1e-1, rtol=1e-1)

    # Larger batch exercising a multi-step batch grid (padding + pipelining).
    B2 = 20
    x2 = jax.random.normal(jax.random.PRNGKey(1), (B2, S, E), dtype=jnp.float32)
    ref2 = jnp.tanh(x2[:, 0, :] @ w1.T + b1) @ w2.T + b2
    logits2 = jax.block_until_ready(
        classifier_forward(x2, w1, b1, w2, b2, block_b=8))
    assert logits2.shape == (B2, CL)
    assert jnp.allclose(logits2, ref2, atol=1e-4, rtol=1e-4)

    print("KERNEL_OK")
</pallas_src>

<mosaic_0001>
module attributes {stable_mosaic.version = 11 : i64} {
  func.func @_classifier_kernel(%arg0: i32, %arg1: memref<8x32xf32, #tpu.memory_space<vmem>>, %arg2: memref<32x32xf32, #tpu.memory_space<vmem>>, %arg3: memref<1x32xf32, #tpu.memory_space<vmem>>, %arg4: memref<128x32xf32, #tpu.memory_space<vmem>>, %arg5: memref<1x128xf32, #tpu.memory_space<vmem>>, %arg6: memref<8x128xf32, #tpu.memory_space<vmem>>) attributes {dimension_semantics = [#tpu.dimension_semantics<parallel>], iteration_bounds = array<i64: 1>, scalar_prefetch = 0 : i64, scratch_operands = 0 : i64, tpu.core_type = #tpu.core_type<tc>, window_params = [{transform_indices = @transform_0, window_bounds = array<i64: 8, 32>}, {pipeline_mode = #tpu.pipeline_mode<synchronous>, transform_indices = @transform_1, window_bounds = array<i64: 32, 32>}, {pipeline_mode = #tpu.pipeline_mode<synchronous>, transform_indices = @transform_2, window_bounds = array<i64: 1, 32>}, {pipeline_mode = #tpu.pipeline_mode<synchronous>, transform_indices = @transform_3, window_bounds = array<i64: 128, 32>}, {pipeline_mode = #tpu.pipeline_mode<synchronous>, transform_indices = @transform_4, window_bounds = array<i64: 1, 128>}, {transform_indices = @transform_5, window_bounds = array<i64: 8, 128>}]} {
    %c0 = arith.constant 0 : index
    %c0_0 = arith.constant 0 : index
    %0 = vector.load %arg1[%c0, %c0_0] : memref<8x32xf32, #tpu.memory_space<vmem>>, vector<8x32xf32>
    %c0_1 = arith.constant 0 : index
    %c0_2 = arith.constant 0 : index
    %1 = vector.load %arg2[%c0_1, %c0_2] : memref<32x32xf32, #tpu.memory_space<vmem>>, vector<32x32xf32>
    %cst = arith.constant dense<0.000000e+00> : vector<8x32xf32>
    %2 = tpu.matmul %0, %1, %cst {dimension_numbers = #tpu.dot_dimension_numbers<[1], [1], [0], [0], [0, 0, 1, 0], [], []>} : vector<8x32xf32>, vector<32x32xf32>, vector<8x32xf32> -> vector<8x32xf32>
    %c0_3 = arith.constant 0 : index
    %c0_4 = arith.constant 0 : index
    %3 = vector.load %arg3[%c0_3, %c0_4] : memref<1x32xf32, #tpu.memory_space<vmem>>, vector<1x32xf32>
    %4 = vector.broadcast %3 : vector<1x32xf32> to vector<8x32xf32>
    %5 = arith.addf %2, %4 : vector<8x32xf32>
    %6 = math.tanh %5 : vector<8x32xf32>
    %c0_5 = arith.constant 0 : index
    %c0_6 = arith.constant 0 : index
    %7 = vector.load %arg4[%c0_5, %c0_6] : memref<128x32xf32, #tpu.memory_space<vmem>>, vector<128x32xf32>
    %cst_7 = arith.constant dense<0.000000e+00> : vector<8x128xf32>
    %8 = tpu.matmul %6, %7, %cst_7 {dimension_numbers = #tpu.dot_dimension_numbers<[1], [1], [0], [0], [0, 0, 1, 0], [], []>} : vector<8x32xf32>, vector<128x32xf32>, vector<8x128xf32> -> vector<8x128xf32>
    %c0_8 = arith.constant 0 : index
    %c0_9 = arith.constant 0 : index
    %9 = vector.load %arg5[%c0_8, %c0_9] : memref<1x128xf32, #tpu.memory_space<vmem>>, vector<1x128xf32>
    %10 = vector.broadcast %9 : vector<1x128xf32> to vector<8x128xf32>
    %11 = arith.addf %8, %10 : vector<8x128xf32>
    %c0_10 = arith.constant 0 : index
    %c0_11 = arith.constant 0 : index
    %12 = vector.load %arg6[%c0_10, %c0_11] : memref<8x128xf32, #tpu.memory_space<vmem>>, vector<8x128xf32>
    tpu.vector_store %arg6[%c0_10, %c0_11], %11 {strides = array<i32>} : memref<8x128xf32, #tpu.memory_space<vmem>>, vector<8x128xf32>,
    return
  }
  func.func @transform_0(%arg0: i32) -> (i32, i32) {
    %c0_i32 = arith.constant 0 : i32
    %c0_i32_0 = arith.constant 0 : i32
    return %arg0, %c0_i32 : i32, i32
  }
  func.func @transform_1(%arg0: i32) -> (i32, i32) {
    %c0_i32 = arith.constant 0 : i32
    %c0_i32_0 = arith.constant 0 : i32
    %c0_i32_1 = arith.constant 0 : i32
    return %c0_i32, %c0_i32_0 : i32, i32
  }
  func.func @transform_2(%arg0: i32) -> (i32, i32) {
    %c0_i32 = arith.constant 0 : i32
    %c0_i32_0 = arith.constant 0 : i32
    %c0_i32_1 = arith.constant 0 : i32
    return %c0_i32, %c0_i32_0 : i32, i32
  }
  func.func @transform_3(%arg0: i32) -> (i32, i32) {
    %c0_i32 = arith.constant 0 : i32
    %c0_i32_0 = arith.constant 0 : i32
    %c0_i32_1 = arith.constant 0 : i32
    return %c0_i32, %c0_i32_0 : i32, i32
  }
  func.func @transform_4(%arg0: i32) -> (i32, i32) {
    %c0_i32 = arith.constant 0 : i32
    %c0_i32_0 = arith.constant 0 : i32
    %c0_i32_1 = arith.constant 0 : i32
    return %c0_i32, %c0_i32_0 : i32, i32
  }
  func.func @transform_5(%arg0: i32) -> (i32, i32) {
    %c0_i32 = arith.constant 0 : i32
    %c0_i32_0 = arith.constant 0 : i32
    return %arg0, %c0_i32 : i32, i32
  }
}

</mosaic_0001>

<llo_original>
// kernel: tpu_custom_call.1
$region0: #{tpu_custom_call.1}
  #allocation0 [shape = 'u32[]', space=smem, size = 0x4, offset = 0x4, fixed_abs, tag = 'smem constant byte address 0x4 - core index']
  #allocation1 [shape = 'u32[144,128]{1,0:T(1,128)}', space=vmem, size = 0x12000, scoped, tag = 'internal scratch']
  %s0 = inlined_call_operand.vmem [shape: f32[8,32], index: 0, kind: input, shape index: {}]
  %s1 = inlined_call_operand.vmem [shape: f32[32,32], index: 1, kind: input, shape index: {}]
  %s2 = inlined_call_operand.vmem [shape: f32[1,32], index: 2, kind: input, shape index: {}]
  %s3 = inlined_call_operand.vmem [shape: f32[128,32], index: 3, kind: input, shape index: {}]
  %s4 = inlined_call_operand.vmem [shape: f32[1,128], index: 4, kind: input, shape index: {}]
  %s5 = inlined_call_operand.hbm [shape: f32[8,128], index: 5, kind: output, shape index: {}]
  %s6 = sld [smem:[#allocation0]]
  $region30: #{tpu_custom_call.1} parent=0
    _
  %s8 = ssub.s32 1, %s6
  %s9 = scalar_select 0, %s8, %s6
  $region1: #{tpu_custom_call.1} parent=0
    #allocation2 [shape = 'u8[4096]{0}', space=vmem, size = 0x1000, scoped, tag = 'output window, operand 0, single buffered']
    #allocation3 [shape = 's32[1]{0}', space=sflag, size = 0x4, scoped, tag = 'scoped memory for tpu_custom_call.1']
    %10 = vsyncpa [#allocation3], 0
    // Predicated region
    $region2: #{tpu_custom_call.1} parent=1 // pred_check
      _
    $region3: #{tpu_custom_call.1} parent=1 // pred_check_branch
      %12 = sbr.rel (0) target = $region5
    $region4: #{tpu_custom_call.1} parent=1 // pred_region
      _
    $region5: #{tpu_custom_call.1} parent=1 // pred_fallthru
      _
    // Predicated region
    $region6: #{tpu_custom_call.1} parent=1 // pred_check
      _
    $region7: #{tpu_custom_call.1} parent=1 // pred_check_branch
      %14 = sbr.rel (0) target = $region9
    $region8: #{tpu_custom_call.1} parent=1 // pred_region
      _
    $region9: #{tpu_custom_call.1} parent=1 // pred_fallthru
      _
    // Predicated region
    $region10: #{tpu_custom_call.1} parent=1 // pred_check
      _
    $region11: #{tpu_custom_call.1} parent=1 // pred_check_branch
      %16 = sbr.rel (0) target = $region13
    $region12: #{tpu_custom_call.1} parent=1 // pred_region
      _
    $region13: #{tpu_custom_call.1} parent=1 // pred_fallthru
      _
    // Predicated region
    $region14: #{tpu_custom_call.1} parent=1 // pred_check
      _
    $region15: #{tpu_custom_call.1} parent=1 // pred_check_branch
      %18 = sbr.rel (0) target = $region17
    $region16: #{tpu_custom_call.1} parent=1 // pred_region
      _
    $region17: #{tpu_custom_call.1} parent=1 // pred_fallthru
      _
    // Predicated region
    $region18: #{tpu_custom_call.1} parent=1 // pred_check
      _
    $region19: #{tpu_custom_call.1} parent=1 // pred_check_branch
      %20 = sbr.rel (0) target = $region21
    $region20: #{tpu_custom_call.1} parent=1 // pred_region
      _
    $region21: #{tpu_custom_call.1} parent=1 // pred_fallthru
      _
    %v21 = vld [vmem:[%s0] sm:$0xff]
    %v22 = vld [vmem:[%s1] sm:$0xff]
    %v23 = vld [vmem:[%s1 + $0x8] sm:$0xff]
    %v24 = vld [vmem:[%s1 + $0x10] sm:$0xff]
    %v25 = vld [vmem:[%s1 + $0x18] sm:$0xff]
    %v26 = vld [vmem:[%s2] sm:$0x1]
    %v28 = vlaneseq
    %v29 = vshrl.u32 %v28, 7
    %v30 = vsub.s32 0, %v29
    %v31 = vrot.slane %v26, %v30
    %vm33 = vcmask 261120
    %v35 = vsel %vm33, %v21, 0
    %v38 = vsel %vm33, %v22, 0
    %v41 = vsel %vm33, %v23, 0
    %v44 = vsel %vm33, %v24, 0
    %v47 = vsel %vm33, %v25, 0
    %49 = vmatprep.subr.mxu0 0.0
    %50 = vmatpush1.xpose.msra.mxu0 %v38
    %51 = vmatprep.subr.mxu0 0.0
    %52 = vmatpush1.xpose.msra.mxu0 %v41
    %53 = vmatprep.subr.mxu0 0.0
    %54 = vmatpush1.xpose.msra.mxu0 %v44
    %55 = vmatprep.subr.mxu0 0.0
    %56 = vmatpush1.xpose.msra.mxu0 %v47
    %57 = vmatprep.subr.mxu0 0.0
    %58 = vmatpush1.xpose.msra.mxu0 0.0
    %59 = vmatprep.subr.mxu0 0.0
    %60 = vmatpush1.xpose.msra.mxu0 0.0
    %61 = vmatprep.subr.mxu0 0.0
    %62 = vmatpush1.xpose.msra.mxu0 0.0
    %63 = vmatprep.subr.mxu0 0.0
    %64 = vmatpush1.xpose.msra.mxu0 0.0
    %65 = vmatprep.subr.mxu0 0.0
    %66 = vmatpush1.xpose.msra.mxu0 0.0
    %67 = vmatprep.subr.mxu0 0.0
    %68 = vmatpush1.xpose.msra.mxu0 0.0
    %69 = vmatprep.subr.mxu0 0.0
    %70 = vmatpush1.xpose.msra.mxu0 0.0
    %71 = vmatprep.subr.mxu0 0.0
    %72 = vmatpush1.xpose.msra.mxu0 0.0
    %73 = vmatprep.subr.mxu0 0.0
    %74 = vmatpush1.xpose.msra.mxu0 0.0
    %75 = vmatprep.subr.mxu0 0.0
    %76 = vmatpush1.xpose.msra.mxu0 0.0
    %77 = vmatprep.subr.mxu0 0.0
    %78 = vmatpush1.xpose.msra.mxu0 0.0
    %79 = vmatprep.subr.mxu0 0.0
    %80 = vmatpush1.xpose.msra.mxu0 0.0
    %81 = vmatprep.subr.mxu0 0.0
    %82 = vmatpush1.xpose.msra.mxu0 0.0
    %83 = vmatprep.subr.mxu0 0.0
    %84 = vmatpush1.xpose.msra.mxu0 0.0
    %85 = vmatprep.subr.mxu0 0.0
    %86 = vmatpush1.xpose.msra.mxu0 0.0
    %87 = vmatprep.subr.mxu0 0.0
    %88 = vmatpush1.xpose.msra.mxu0 0.0
    %89 = vmatprep.subr.mxu0 0.0
    %90 = vmatpush1.xpose.msra.mxu0 0.0
    %91 = vmatprep.subr.mxu0 0.0
    %92 = vmatpush1.xpose.msra.mxu0 0.0
    %93 = vmatprep.subr.mxu0 0.0
    %94 = vmatpush1.xpose.msra.mxu0 0.0
    %95 = vmatprep.subr.mxu0 0.0
    %96 = vmatpush1.xpose.msra.mxu0 0.0
    %97 = vmatprep.subr.mxu0 0.0
    %98 = vmatpush1.xpose.msra.mxu0 0.0
    %99 = vmatprep.subr.mxu0 0.0
    %100 = vmatpush1.xpose.msra.mxu0 0.0
    %101 = vmatprep.subr.mxu0 0.0
    %102 = vmatpush1.xpose.msra.mxu0 0.0
    %103 = vmatprep.subr.mxu0 0.0
    %104 = vmatpush1.xpose.msra.mxu0 0.0
    %105 = vmatprep.subr.mxu0 0.0
    %106 = vmatpush1.xpose.msra.mxu0 0.0
    %107 = vmatprep.subr.mxu0 0.0
    %108 = vmatpush1.xpose.msra.mxu0 0.0
    %109 = vmatprep.subr.mxu0 0.0
    %110 = vmatpush1.xpose.msra.mxu0 0.0
    %111 = vmatprep.subr.mxu0 0.0
    %112 = vmatpush1.xpose.msra.mxu0 0.0
    %113 = vmatprep.mubr.f32.mxu0 0.0
    %114 = vmatmul.mubr.f32.gmra.mrb[0].mxu0 %v35
    %v115 = vpop.f32.mrb[0].mxu0
    %v116 = vadd.f32 %v31, %v115
    %v117 = vpop.f32.mrb[0].mxu0
    %118 = vdwg.mxu0
    %v119 = vtanh.pop %v116
    %v120 = vld [vmem:[%s3] sm:$0xff]
    %v121 = vld [vmem:[%s3 + $0x8] sm:$0xff]
    %v122 = vld [vmem:[%s3 + $0x10] sm:$0xff]
    %v123 = vld [vmem:[%s3 + $0x18] sm:$0xff]
    %v124 = vld [vmem:[%s3 + $0x20] sm:$0xff]
    %v125 = vld [vmem:[%s3 + $0x28] sm:$0xff]
    %v126 = vld [vmem:[%s3 + $0x30] sm:$0xff]
    %v127 = vld [vmem:[%s3 + $0x38] sm:$0xff]
    %v128 = vld [vmem:[%s3 + $0x40] sm:$0xff]
    %v129 = vld [vmem:[%s3 + $0x48] sm:$0xff]
    %v130 = vld [vmem:[%s3 + $0x50] sm:$0xff]
    %v131 = vld [vmem:[%s3 + $0x58] sm:$0xff]
    %v132 = vld [vmem:[%s3 + $0x60] sm:$0xff]
    %v133 = vld [vmem:[%s3 + $0x68] sm:$0xff]
    %v134 = vld [vmem:[%s3 + $0x70] sm:$0xff]
    %v135 = vld [vmem:[%s3 + $0x78] sm:$0xff]
    %v136 = vld [vmem:[%s4] sm:$0x1]
    %v138 = vlaneseq
    %v139 = vshrl.u32 %v138, 7
    %v140 = vsub.s32 0, %v139
    %v141 = vrot.slane %v136, %v140
    %v144 = vsel %vm33, %v119, 0
    %v147 = vsel %vm33, %v120, 0
    %v150 = vsel %vm33, %v121, 0
    %v153 = vsel %vm33, %v122, 0
    %v156 = vsel %vm33, %v123, 0
    %v159 = vsel %vm33, %v124, 0
    %v162 = vsel %vm33, %v125, 0
    %v165 = vsel %vm33, %v126, 0
    %v168 = vsel %vm33, %v127, 0
    %v171 = vsel %vm33, %v128, 0
    %v174 = vsel %vm33, %v129, 0
    %v177 = vsel %vm33, %v130, 0
    %v180 = vsel %vm33, %v131, 0
    %v183 = vsel %vm33, %v132, 0
    %v186 = vsel %vm33, %v133, 0
    %v189 = vsel %vm33, %v134, 0
    %v192 = vsel %vm33, %v135, 0
    %194 = vmatprep.subr.mxu0 0.0
    %195 = vmatpush1.xpose.msra.mxu0 %v147
    %196 = vmatprep.subr.mxu0 0.0
    %197 = vmatpush1.xpose.msra.mxu0 %v150
    %198 = vmatprep.subr.mxu0 0.0
    %199 = vmatpush1.xpose.msra.mxu0 %v153
    %200 = vmatprep.subr.mxu0 0.0
    %201 = vmatpush1.xpose.msra.mxu0 %v156
    %202 = vmatprep.subr.mxu0 0.0
    %203 = vmatpush1.xpose.msra.mxu0 %v159
    %204 = vmatprep.subr.mxu0 0.0
    %205 = vmatpush1.xpose.msra.mxu0 %v162
    %206 = vmatprep.subr.mxu0 0.0
    %207 = vmatpush1.xpose.msra.mxu0 %v165
    %208 = vmatprep.subr.mxu0 0.0
    %209 = vmatpush1.xpose.msra.mxu0 %v168
    %210 = vmatprep.subr.mxu0 0.0
    %211 = vmatpush1.xpose.msra.mxu0 %v171
    %212 = vmatprep.subr.mxu0 0.0
    %213 = vmatpush1.xpose.msra.mxu0 %v174
    %214 = vmatprep.subr.mxu0 0.0
    %215 = vmatpush1.xpose.msra.mxu0 %v177
    %216 = vmatprep.subr.mxu0 0.0
    %217 = vmatpush1.xpose.msra.mxu0 %v180
    %218 = vmatprep.subr.mxu0 0.0
    %219 = vmatpush1.xpose.msra.mxu0 %v183
    %220 = vmatprep.subr.mxu0 0.0
    %221 = vmatpush1.xpose.msra.mxu0 %v186
    %222 = vmatprep.subr.mxu0 0.0
    %223 = vmatpush1.xpose.msra.mxu0 %v189
    %224 = vmatprep.subr.mxu0 0.0
    %225 = vmatpush1.xpose.msra.mxu0 %v192
    %226 = vmatprep.subr.mxu0 0.0
    %227 = vmatpush1.xpose.msra.mxu0 0.0
    %228 = vmatprep.subr.mxu0 0.0
    %229 = vmatpush1.xpose.msra.mxu0 0.0
    %230 = vmatprep.subr.mxu0 0.0
    %231 = vmatpush1.xpose.msra.mxu0 0.0
    %232 = vmatprep.subr.mxu0 0.0
    %233 = vmatpush1.xpose.msra.mxu0 0.0
    %234 = vmatprep.subr.mxu0 0.0
    %235 = vmatpush1.xpose.msra.mxu0 0.0
    %236 = vmatprep.subr.mxu0 0.0
    %237 = vmatpush1.xpose.msra.mxu0 0.0
    %238 = vmatprep.subr.mxu0 0.0
    %239 = vmatpush1.xpose.msra.mxu0 0.0
    %240 = vmatprep.subr.mxu0 0.0
    %241 = vmatpush1.xpose.msra.mxu0 0.0
    %242 = vmatprep.subr.mxu0 0.0
    %243 = vmatpush1.xpose.msra.mxu0 0.0
    %244 = vmatprep.subr.mxu0 0.0
    %245 = vmatpush1.xpose.msra.mxu0 0.0
    %246 = vmatprep.subr.mxu0 0.0
    %247 = vmatpush1.xpose.msra.mxu0 0.0
    %248 = vmatprep.subr.mxu0 0.0
    %249 = vmatpush1.xpose.msra.mxu0 0.0
    %250 = vmatprep.subr.mxu0 0.0
    %251 = vmatpush1.xpose.msra.mxu0 0.0
    %252 = vmatprep.subr.mxu0 0.0
    %253 = vmatpush1.xpose.msra.mxu0 0.0
    %254 = vmatprep.subr.mxu0 0.0
    %255 = vmatpush1.xpose.msra.mxu0 0.0
    %256 = vmatprep.subr.mxu0 0.0
    %257 = vmatpush1.xpose.msra.mxu0 0.0
    %258 = vmatprep.mubr.f32.mxu0 0.0
    %259 = vmatmul.mubr.f32.gmra.mrb[0].mxu0 %v144
    %v260 = vpop.f32.mrb[0].mxu0
    %v261 = vadd.f32 %v141, %v260
    %v262 = vpop.f32.mrb[0].mxu0
    %263 = vdwg.mxu0
    %264 = vst [vmem:[#allocation2] sm:$0xff] %v261
    // Predicated region
    $region22: #{tpu_custom_call.1} parent=1 // pred_check
      _
    $region23: #{tpu_custom_call.1} parent=1 // pred_check_branch
      %266 = sbr.rel (0) target = $region25
    $region24: #{tpu_custom_call.1} parent=1 // pred_region
      %s268 = ssub.s32 128, 128
      %269 = vsyncadd [#allocation3], %s268
      %s271 = sshll.u32 [#allocation2], 4
      %s272 = int_to_ptr.vmem [resolvable:$true] %s271
      %274 = dma.vmem_to_hbm [thread:$0]  %s272, 128, %s5, [#allocation3]
    $region25: #{tpu_custom_call.1} parent=1 // pred_fallthru
      _
    // Predicated region
    $region26: #{tpu_custom_call.1} parent=1 // pred_check
      _
    $region27: #{tpu_custom_call.1} parent=1 // pred_check_branch
      %276 = sbr.rel (0) target = $region29
    $region28: #{tpu_custom_call.1} parent=1 // pred_region
      %277 = dma.done [#allocation3], 128
    $region29: #{tpu_custom_call.1} parent=1 // pred_fallthru
      _
    %278 = vsyncpa [#allocation3], 1

</llo_original>
